<compile_context>
chip_gen: v5e
topology: v5e:2x2
jax: 0.10.0
libtpu: 0.0.40
codegen_flags: <defaults>
</compile_context>

<pallas_src>
import jax
import jax.numpy as jnp
from jax.experimental import pallas as pl
from jax.experimental.pallas import tpu as pltpu


def _residual_conv1x1_kernel(x_ref, w_ref, b_ref, o_ref):
    # x_ref / o_ref: (1, C, S) VMEM block, spatial S on the lane axis.
    # w_ref: (C, C) f32 in SMEM, w[out_ch, in_ch].
    # b_ref: (C,)   f32 in SMEM.
    C = x_ref.shape[1]
    for o in range(C):
        row_o = x_ref[0, o, :].astype(jnp.float32)
        # Residual + bias + diagonal conv term all reuse the vreg-resident row.
        acc = row_o + (w_ref[o, o] * row_o + b_ref[o])
        for i in range(C):
            if i == o:
                continue
            acc = acc + w_ref[o, i] * x_ref[0, i, :].astype(jnp.float32)
        o_ref[0, o, :] = acc.astype(o_ref.dtype)


def _pick_spatial_tile(hw, c, itemsize, budget_bytes=2 << 20):
    """Largest legal lane-axis tile within a per-tile VMEM byte budget."""
    cap = max(128, budget_bytes // max(1, c * itemsize))
    if hw <= cap or hw % 128 != 0:
        return hw                      # full spatial extent is always legal
    t = (cap // 128) * 128
    while t >= 128:
        if hw % t == 0:
            return t
        t -= 128
    return hw


def residual_add_conv1x1(x_nchw, weight, bias):
    """out = Conv1x1(x, weight, bias) + x  (ResidualAdd with identity shortcut)."""
    N, C, H, W = x_nchw.shape
    assert weight.shape == (C, C) and bias.shape == (C,)
    HW = H * W

    x3 = x_nchw.reshape(N, C, HW)                 # contiguous merge: no transpose
    tile_sp = _pick_spatial_tile(HW, C, jnp.dtype(x3.dtype).itemsize)
    n_sp = HW // tile_sp

    w_f32 = weight.astype(jnp.float32)            # scalar params, read from SMEM
    b_f32 = bias.astype(jnp.float32)

    out3 = pl.pallas_call(
        _residual_conv1x1_kernel,
        out_shape=jax.ShapeDtypeStruct((N, C, HW), x3.dtype),
        grid_spec=pltpu.PrefetchScalarGridSpec(
            num_scalar_prefetch=0,
            grid=(N, n_sp),
            in_specs=[
                pl.BlockSpec((1, C, tile_sp), lambda n, s: (n, 0, s)),       # x
                pl.BlockSpec(memory_space=pltpu.MemorySpace.SMEM),           # weight
                pl.BlockSpec(memory_space=pltpu.MemorySpace.SMEM),           # bias
            ],
            out_specs=pl.BlockSpec((1, C, tile_sp), lambda n, s: (n, 0, s)),
        ),
        compiler_params=pltpu.CompilerParams(
            dimension_semantics=("parallel", "parallel")),
    )(x3, w_f32, b_f32)

    return out3.reshape(N, C, H, W)


def _reference(x_nchw, weight, bias):
    # Pure-JAX reference of ResidualAdd(block=Conv1x1, shortcut=None)
    y = jnp.einsum("nchw,oc->nohw", x_nchw, weight) + bias[None, :, None, None]
    return y + x_nchw


if __name__ == "__main__":
    key = jax.random.PRNGKey(0)
    kx, kw, kb = jax.random.split(key, 3)

    N, C, H, W = 2, 4, 16, 16
    x = jax.random.normal(kx, (N, C, H, W), dtype=jnp.float32)
    # Deterministic parameter init mimicking Conv2d(C, C, 1):
    # weight (C_out, C_in), bias (C_out,)
    fan_in = C
    bound = 1.0 / (fan_in ** 0.5)
    weight = jax.random.uniform(kw, (C, C), minval=-bound, maxval=bound,
                                dtype=jnp.float32)
    bias = jax.random.uniform(kb, (C,), minval=-bound, maxval=bound,
                              dtype=jnp.float32)

    out = residual_add_conv1x1(x, weight, bias)
    out = jax.block_until_ready(out)

    ref = _reference(x, weight, bias)
    assert out.shape == (N, C, H, W)
    assert jnp.allclose(out, ref, atol=1e-5, rtol=1e-5)

    print("KERNEL_OK")
</pallas_src>

<mosaic_0001>
module attributes {stable_mosaic.version = 11 : i64} {
  func.func @_residual_conv1x1_kernel(%arg0: i32, %arg1: i32, %arg2: memref<1x4x256xf32, #tpu.memory_space<vmem>>, %arg3: memref<4x4xf32, #tpu.memory_space<smem>>, %arg4: memref<4xf32, #tpu.memory_space<smem>>, %arg5: memref<1x4x256xf32, #tpu.memory_space<vmem>>) attributes {dimension_semantics = [#tpu.dimension_semantics<parallel>, #tpu.dimension_semantics<parallel>], iteration_bounds = array<i64: 2, 1>, scalar_prefetch = 0 : i64, scratch_operands = 0 : i64, tpu.core_type = #tpu.core_type<tc>, window_params = [{transform_indices = @transform_0, window_bounds = array<i64: 1, 4, 256>}, {transform_indices = @transform_1, window_bounds = array<i64: 4, 4>}, {transform_indices = @transform_2, window_bounds = array<i64: 4>}, {transform_indices = @transform_3, window_bounds = array<i64: 1, 4, 256>}]} {
    %c0 = arith.constant 0 : index
    %c0_0 = arith.constant 0 : index
    %c0_1 = arith.constant 0 : index
    %0 = vector.load %arg2[%c0, %c0_0, %c0_1] : memref<1x4x256xf32, #tpu.memory_space<vmem>>, vector<1x1x256xf32>
    %1 = vector.shape_cast %0 : vector<1x1x256xf32> to vector<256xf32>
    %c0_2 = arith.constant 0 : index
    %c0_3 = arith.constant 0 : index
    %2 = memref.load %arg3[%c0_2, %c0_3] : memref<4x4xf32, #tpu.memory_space<smem>>
    %3 = vector.broadcast %2 : f32 to vector<256xf32>
    %4 = arith.mulf %3, %1 : vector<256xf32>
    %c0_4 = arith.constant 0 : index
    %5 = memref.load %arg4[%c0_4] : memref<4xf32, #tpu.memory_space<smem>>
    %6 = vector.broadcast %5 : f32 to vector<256xf32>
    %7 = arith.addf %4, %6 : vector<256xf32>
    %8 = arith.addf %1, %7 : vector<256xf32>
    %c0_5 = arith.constant 0 : index
    %c1 = arith.constant 1 : index
    %9 = memref.load %arg3[%c0_5, %c1] : memref<4x4xf32, #tpu.memory_space<smem>>
    %c0_6 = arith.constant 0 : index
    %c1_7 = arith.constant 1 : index
    %c0_8 = arith.constant 0 : index
    %10 = vector.load %arg2[%c0_6, %c1_7, %c0_8] : memref<1x4x256xf32, #tpu.memory_space<vmem>>, vector<1x1x256xf32>
    %11 = vector.shape_cast %10 : vector<1x1x256xf32> to vector<256xf32>
    %12 = vector.broadcast %9 : f32 to vector<256xf32>
    %13 = arith.mulf %12, %11 : vector<256xf32>
    %14 = arith.addf %8, %13 : vector<256xf32>
    %c0_9 = arith.constant 0 : index
    %c2 = arith.constant 2 : index
    %15 = memref.load %arg3[%c0_9, %c2] : memref<4x4xf32, #tpu.memory_space<smem>>
    %c0_10 = arith.constant 0 : index
    %c2_11 = arith.constant 2 : index
    %c0_12 = arith.constant 0 : index
    %16 = vector.load %arg2[%c0_10, %c2_11, %c0_12] : memref<1x4x256xf32, #tpu.memory_space<vmem>>, vector<1x1x256xf32>
    %17 = vector.shape_cast %16 : vector<1x1x256xf32> to vector<256xf32>
    %18 = vector.broadcast %15 : f32 to vector<256xf32>
    %19 = arith.mulf %18, %17 : vector<256xf32>
    %20 = arith.addf %14, %19 : vector<256xf32>
    %c0_13 = arith.constant 0 : index
    %c3 = arith.constant 3 : index
    %21 = memref.load %arg3[%c0_13, %c3] : memref<4x4xf32, #tpu.memory_space<smem>>
    %c0_14 = arith.constant 0 : index
    %c3_15 = arith.constant 3 : index
    %c0_16 = arith.constant 0 : index
    %22 = vector.load %arg2[%c0_14, %c3_15, %c0_16] : memref<1x4x256xf32, #tpu.memory_space<vmem>>, vector<1x1x256xf32>
    %23 = vector.shape_cast %22 : vector<1x1x256xf32> to vector<256xf32>
    %24 = vector.broadcast %21 : f32 to vector<256xf32>
    %25 = arith.mulf %24, %23 : vector<256xf32>
    %26 = arith.addf %20, %25 : vector<256xf32>
    %c0_17 = arith.constant 0 : index
    %c0_18 = arith.constant 0 : index
    %c0_19 = arith.constant 0 : index
    %27 = vector.load %arg5[%c0_17, %c0_18, %c0_19] : memref<1x4x256xf32, #tpu.memory_space<vmem>>, vector<1x1x256xf32>
    %28 = vector.shape_cast %27 : vector<1x1x256xf32> to vector<256xf32>
    %29 = vector.shape_cast %26 : vector<256xf32> to vector<1x1x256xf32>
    tpu.vector_store %arg5[%c0_17, %c0_18, %c0_19], %29 {strides = array<i32>} : memref<1x4x256xf32, #tpu.memory_space<vmem>>, vector<1x1x256xf32>,
    %c0_20 = arith.constant 0 : index
    %c1_21 = arith.constant 1 : index
    %c0_22 = arith.constant 0 : index
    %30 = vector.load %arg2[%c0_20, %c1_21, %c0_22] : memref<1x4x256xf32, #tpu.memory_space<vmem>>, vector<1x1x256xf32>
    %31 = vector.shape_cast %30 : vector<1x1x256xf32> to vector<256xf32>
    %c1_23 = arith.constant 1 : index
    %c1_24 = arith.constant 1 : index
    %32 = memref.load %arg3[%c1_23, %c1_24] : memref<4x4xf32, #tpu.memory_space<smem>>
    %33 = vector.broadcast %32 : f32 to vector<256xf32>
    %34 = arith.mulf %33, %31 : vector<256xf32>
    %c1_25 = arith.constant 1 : index
    %35 = memref.load %arg4[%c1_25] : memref<4xf32, #tpu.memory_space<smem>>
    %36 = vector.broadcast %35 : f32 to vector<256xf32>
    %37 = arith.addf %34, %36 : vector<256xf32>
    %38 = arith.addf %31, %37 : vector<256xf32>
    %c1_26 = arith.constant 1 : index
    %c0_27 = arith.constant 0 : index
    %39 = memref.load %arg3[%c1_26, %c0_27] : memref<4x4xf32, #tpu.memory_space<smem>>
    %c0_28 = arith.constant 0 : index
    %c0_29 = arith.constant 0 : index
    %c0_30 = arith.constant 0 : index
    %40 = vector.load %arg2[%c0_28, %c0_29, %c0_30] : memref<1x4x256xf32, #tpu.memory_space<vmem>>, vector<1x1x256xf32>
    %41 = vector.shape_cast %40 : vector<1x1x256xf32> to vector<256xf32>
    %42 = vector.broadcast %39 : f32 to vector<256xf32>
    %43 = arith.mulf %42, %41 : vector<256xf32>
    %44 = arith.addf %38, %43 : vector<256xf32>
    %c1_31 = arith.constant 1 : index
    %c2_32 = arith.constant 2 : index
    %45 = memref.load %arg3[%c1_31, %c2_32] : memref<4x4xf32, #tpu.memory_space<smem>>
    %c0_33 = arith.constant 0 : index
    %c2_34 = arith.constant 2 : index
    %c0_35 = arith.constant 0 : index
    %46 = vector.load %arg2[%c0_33, %c2_34, %c0_35] : memref<1x4x256xf32, #tpu.memory_space<vmem>>, vector<1x1x256xf32>
    %47 = vector.shape_cast %46 : vector<1x1x256xf32> to vector<256xf32>
    %48 = vector.broadcast %45 : f32 to vector<256xf32>
    %49 = arith.mulf %48, %47 : vector<256xf32>
    %50 = arith.addf %44, %49 : vector<256xf32>
    %c1_36 = arith.constant 1 : index
    %c3_37 = arith.constant 3 : index
    %51 = memref.load %arg3[%c1_36, %c3_37] : memref<4x4xf32, #tpu.memory_space<smem>>
    %c0_38 = arith.constant 0 : index
    %c3_39 = arith.constant 3 : index
    %c0_40 = arith.constant 0 : index
    %52 = vector.load %arg2[%c0_38, %c3_39, %c0_40] : memref<1x4x256xf32, #tpu.memory_space<vmem>>, vector<1x1x256xf32>
    %53 = vector.shape_cast %52 : vector<1x1x256xf32> to vector<256xf32>
    %54 = vector.broadcast %51 : f32 to vector<256xf32>
    %55 = arith.mulf %54, %53 : vector<256xf32>
    %56 = arith.addf %50, %55 : vector<256xf32>
    %c0_41 = arith.constant 0 : index
    %c1_42 = arith.constant 1 : index
    %c0_43 = arith.constant 0 : index
    %57 = vector.load %arg5[%c0_41, %c1_42, %c0_43] : memref<1x4x256xf32, #tpu.memory_space<vmem>>, vector<1x1x256xf32>
    %58 = vector.shape_cast %57 : vector<1x1x256xf32> to vector<256xf32>
    %59 = vector.shape_cast %56 : vector<256xf32> to vector<1x1x256xf32>
    tpu.vector_store %arg5[%c0_41, %c1_42, %c0_43], %59 {strides = array<i32>} : memref<1x4x256xf32, #tpu.memory_space<vmem>>, vector<1x1x256xf32>,
    %c0_44 = arith.constant 0 : index
    %c2_45 = arith.constant 2 : index
    %c0_46 = arith.constant 0 : index
    %60 = vector.load %arg2[%c0_44, %c2_45, %c0_46] : memref<1x4x256xf32, #tpu.memory_space<vmem>>, vector<1x1x256xf32>
    %61 = vector.shape_cast %60 : vector<1x1x256xf32> to vector<256xf32>
    %c2_47 = arith.constant 2 : index
    %c2_48 = arith.constant 2 : index
    %62 = memref.load %arg3[%c2_47, %c2_48] : memref<4x4xf32, #tpu.memory_space<smem>>
    %63 = vector.broadcast %62 : f32 to vector<256xf32>
    %64 = arith.mulf %63, %61 : vector<256xf32>
    %c2_49 = arith.constant 2 : index
    %65 = memref.load %arg4[%c2_49] : memref<4xf32, #tpu.memory_space<smem>>
    %66 = vector.broadcast %65 : f32 to vector<256xf32>
    %67 = arith.addf %64, %66 : vector<256xf32>
    %68 = arith.addf %61, %67 : vector<256xf32>
    %c2_50 = arith.constant 2 : index
    %c0_51 = arith.constant 0 : index
    %69 = memref.load %arg3[%c2_50, %c0_51] : memref<4x4xf32, #tpu.memory_space<smem>>
    %c0_52 = arith.constant 0 : index
    %c0_53 = arith.constant 0 : index
    %c0_54 = arith.constant 0 : index
    %70 = vector.load %arg2[%c0_52, %c0_53, %c0_54] : memref<1x4x256xf32, #tpu.memory_space<vmem>>, vector<1x1x256xf32>
    %71 = vector.shape_cast %70 : vector<1x1x256xf32> to vector<256xf32>
    %72 = vector.broadcast %69 : f32 to vector<256xf32>
    %73 = arith.mulf %72, %71 : vector<256xf32>
    %74 = arith.addf %68, %73 : vector<256xf32>
    %c2_55 = arith.constant 2 : index
    %c1_56 = arith.constant 1 : index
    %75 = memref.load %arg3[%c2_55, %c1_56] : memref<4x4xf32, #tpu.memory_space<smem>>
    %c0_57 = arith.constant 0 : index
    %c1_58 = arith.constant 1 : index
    %c0_59 = arith.constant 0 : index
    %76 = vector.load %arg2[%c0_57, %c1_58, %c0_59] : memref<1x4x256xf32, #tpu.memory_space<vmem>>, vector<1x1x256xf32>
    %77 = vector.shape_cast %76 : vector<1x1x256xf32> to vector<256xf32>
    %78 = vector.broadcast %75 : f32 to vector<256xf32>
    %79 = arith.mulf %78, %77 : vector<256xf32>
    %80 = arith.addf %74, %79 : vector<256xf32>
    %c2_60 = arith.constant 2 : index
    %c3_61 = arith.constant 3 : index
    %81 = memref.load %arg3[%c2_60, %c3_61] : memref<4x4xf32, #tpu.memory_space<smem>>
    %c0_62 = arith.constant 0 : index
    %c3_63 = arith.constant 3 : index
    %c0_64 = arith.constant 0 : index
    %82 = vector.load %arg2[%c0_62, %c3_63, %c0_64] : memref<1x4x256xf32, #tpu.memory_space<vmem>>, vector<1x1x256xf32>
    %83 = vector.shape_cast %82 : vector<1x1x256xf32> to vector<256xf32>
    %84 = vector.broadcast %81 : f32 to vector<256xf32>
    %85 = arith.mulf %84, %83 : vector<256xf32>
    %86 = arith.addf %80, %85 : vector<256xf32>
    %c0_65 = arith.constant 0 : index
    %c2_66 = arith.constant 2 : index
    %c0_67 = arith.constant 0 : index
    %87 = vector.load %arg5[%c0_65, %c2_66, %c0_67] : memref<1x4x256xf32, #tpu.memory_space<vmem>>, vector<1x1x256xf32>
    %88 = vector.shape_cast %87 : vector<1x1x256xf32> to vector<256xf32>
    %89 = vector.shape_cast %86 : vector<256xf32> to vector<1x1x256xf32>
    tpu.vector_store %arg5[%c0_65, %c2_66, %c0_67], %89 {strides = array<i32>} : memref<1x4x256xf32, #tpu.memory_space<vmem>>, vector<1x1x256xf32>,
    %c0_68 = arith.constant 0 : index
    %c3_69 = arith.constant 3 : index
    %c0_70 = arith.constant 0 : index
    %90 = vector.load %arg2[%c0_68, %c3_69, %c0_70] : memref<1x4x256xf32, #tpu.memory_space<vmem>>, vector<1x1x256xf32>
    %91 = vector.shape_cast %90 : vector<1x1x256xf32> to vector<256xf32>
    %c3_71 = arith.constant 3 : index
    %c3_72 = arith.constant 3 : index
    %92 = memref.load %arg3[%c3_71, %c3_72] : memref<4x4xf32, #tpu.memory_space<smem>>
    %93 = vector.broadcast %92 : f32 to vector<256xf32>
    %94 = arith.mulf %93, %91 : vector<256xf32>
    %c3_73 = arith.constant 3 : index
    %95 = memref.load %arg4[%c3_73] : memref<4xf32, #tpu.memory_space<smem>>
    %96 = vector.broadcast %95 : f32 to vector<256xf32>
    %97 = arith.addf %94, %96 : vector<256xf32>
    %98 = arith.addf %91, %97 : vector<256xf32>
    %c3_74 = arith.constant 3 : index
    %c0_75 = arith.constant 0 : index
    %99 = memref.load %arg3[%c3_74, %c0_75] : memref<4x4xf32, #tpu.memory_space<smem>>
    %c0_76 = arith.constant 0 : index
    %c0_77 = arith.constant 0 : index
    %c0_78 = arith.constant 0 : index
    %100 = vector.load %arg2[%c0_76, %c0_77, %c0_78] : memref<1x4x256xf32, #tpu.memory_space<vmem>>, vector<1x1x256xf32>
    %101 = vector.shape_cast %100 : vector<1x1x256xf32> to vector<256xf32>
    %102 = vector.broadcast %99 : f32 to vector<256xf32>
    %103 = arith.mulf %102, %101 : vector<256xf32>
    %104 = arith.addf %98, %103 : vector<256xf32>
    %c3_79 = arith.constant 3 : index
    %c1_80 = arith.constant 1 : index
    %105 = memref.load %arg3[%c3_79, %c1_80] : memref<4x4xf32, #tpu.memory_space<smem>>
    %c0_81 = arith.constant 0 : index
    %c1_82 = arith.constant 1 : index
    %c0_83 = arith.constant 0 : index
    %106 = vector.load %arg2[%c0_81, %c1_82, %c0_83] : memref<1x4x256xf32, #tpu.memory_space<vmem>>, vector<1x1x256xf32>
    %107 = vector.shape_cast %106 : vector<1x1x256xf32> to vector<256xf32>
    %108 = vector.broadcast %105 : f32 to vector<256xf32>
    %109 = arith.mulf %108, %107 : vector<256xf32>
    %110 = arith.addf %104, %109 : vector<256xf32>
    %c3_84 = arith.constant 3 : index
    %c2_85 = arith.constant 2 : index
    %111 = memref.load %arg3[%c3_84, %c2_85] : memref<4x4xf32, #tpu.memory_space<smem>>
    %c0_86 = arith.constant 0 : index
    %c2_87 = arith.constant 2 : index
    %c0_88 = arith.constant 0 : index
    %112 = vector.load %arg2[%c0_86, %c2_87, %c0_88] : memref<1x4x256xf32, #tpu.memory_space<vmem>>, vector<1x1x256xf32>
    %113 = vector.shape_cast %112 : vector<1x1x256xf32> to vector<256xf32>
    %114 = vector.broadcast %111 : f32 to vector<256xf32>
    %115 = arith.mulf %114, %113 : vector<256xf32>
    %116 = arith.addf %110, %115 : vector<256xf32>
    %c0_89 = arith.constant 0 : index
    %c3_90 = arith.constant 3 : index
    %c0_91 = arith.constant 0 : index
    %117 = vector.load %arg5[%c0_89, %c3_90, %c0_91] : memref<1x4x256xf32, #tpu.memory_space<vmem>>, vector<1x1x256xf32>
    %118 = vector.shape_cast %117 : vector<1x1x256xf32> to vector<256xf32>
    %119 = vector.shape_cast %116 : vector<256xf32> to vector<1x1x256xf32>
    tpu.vector_store %arg5[%c0_89, %c3_90, %c0_91], %119 {strides = array<i32>} : memref<1x4x256xf32, #tpu.memory_space<vmem>>, vector<1x1x256xf32>,
    return
  }
  func.func @transform_0(%arg0: i32, %arg1: i32) -> (i32, i32, i32) {
    %c0_i32 = arith.constant 0 : i32
    %c0_i32_0 = arith.constant 0 : i32
    return %arg0, %c0_i32, %arg1 : i32, i32, i32
  }
  func.func @transform_1(%arg0: i32, %arg1: i32) -> (i32, i32) {
    %c0_i32 = arith.constant 0 : i32
    %c0_i32_0 = arith.constant 0 : i32
    %c0_i32_1 = arith.constant 0 : i32
    return %c0_i32, %c0_i32_0 : i32, i32
  }
  func.func @transform_2(%arg0: i32, %arg1: i32) -> i32 {
    %c0_i32 = arith.constant 0 : i32
    %c0_i32_0 = arith.constant 0 : i32
    return %c0_i32 : i32
  }
  func.func @transform_3(%arg0: i32, %arg1: i32) -> (i32, i32, i32) {
    %c0_i32 = arith.constant 0 : i32
    %c0_i32_0 = arith.constant 0 : i32
    return %arg0, %c0_i32, %arg1 : i32, i32, i32
  }
}

</mosaic_0001>

<llo_original>
// kernel: tpu_custom_call.1
$region0: #{tpu_custom_call.1}
  #allocation0 [shape = 'u32[]', space=smem, size = 0x4, offset = 0x4, fixed_abs, tag = 'smem constant byte address 0x4 - core index']
  #allocation1 [shape = 'u32[72,128]{1,0:T(1,128)}', space=vmem, size = 0x9000, scoped, tag = 'internal scratch']
  %s0 = inlined_call_operand.hbm [shape: f32[2,4,256], index: 0, kind: input, shape index: {}]
  %s1 = inlined_call_operand.hbm [shape: f32[4,4], index: 1, kind: input, shape index: {}]
  %s2 = inlined_call_operand.vmem [shape: f32[4], index: 2, kind: input, shape index: {}]
  %s3 = inlined_call_operand.hbm [shape: f32[2,4,256], index: 3, kind: output, shape index: {}]
  %s4 = sld [smem:[#allocation0]]
  $region57: #{tpu_custom_call.1} parent=0
    _
  %s6 = ssub.s32 1, %s4
  %s7 = scalar_select 0, %s6, %s4
  $region1: #{tpu_custom_call.1} parent=0
    #allocation2 [shape = 'u8[8192]{0}', space=vmem, size = 0x2000, scoped, tag = 'input window, operand 0']
    #allocation3 [shape = 's32[2]{0}', space=sflag, size = 0x8, scoped, tag = 'scoped memory for tpu_custom_call.1']
    #allocation4 [shape = 's32[2]{0}', space=sflag, size = 0x8, scoped, tag = 'scoped memory for tpu_custom_call.1']
    #allocation5 [shape = 's32[2]{0}', space=sflag, size = 0x8, scoped, tag = 'scoped memory for tpu_custom_call.1']
    #allocation6 [shape = 's32[2]{0}', space=sflag, size = 0x8, scoped, tag = 'scoped memory for tpu_custom_call.1']
    #allocation7 [shape = 'u8[2048]{0}', space=smem, size = 0x800, scoped, tag = 'input window, operand 1, single buffered']
    #allocation8 [shape = 'u8[512]{0}', space=smem, size = 0x200, scoped, tag = 'input window, operand 2, single buffered']
    #allocation9 [shape = 'u8[8192]{0}', space=vmem, size = 0x2000, scoped, tag = 'output window, operand 0']
    %8 = vsyncpa [#allocation3], 0
    %s9 = scalar_lea.sflag [#allocation3], 1
    %10 = vsyncpa %s9, 0
    %11 = vsyncpa [#allocation5], 0
    %12 = vsyncpa [#allocation6], 0
    %13 = vsyncpa [#allocation4], 0
    %s14 = scalar_lea.sflag [#allocation4], 1
    %15 = vsyncpa %s14, 0
    loop: start=0, step=1, limit=4
    $region2: #{tpu_custom_call.1} parent=1 // loop_pre_header
      _
    $region3: #{tpu_custom_call.1} parent=1 // loop_header
      %s17 = sphi 0, %s21
      %p18 = scmp.ge.s32.totalorder %s17, 4
      %s24 = sphi 0, %s36
      %s25 = sphi 0, %s32
      %s26 = sphi 0, %s24
      %s27 = sphi 0, %s25
      %s28 = sphi 0, %s26
      %s29 = sphi 0, %s27
      %s41 = sphi 0, %s43
      %s44 = sphi 0, %s41
      %s45 = sphi 0, %s44
      %s61 = sphi 0, %s45
      %s65 = sphi 0, %s65
      %s67 = sphi 0, %s65
      %s68 = sphi 0, %s67
      %s82 = sphi 0, %s68
      %s86 = sphi 0, %s86
      %s88 = sphi 0, %s86
      %s89 = sphi 0, %s88
      %s103 = sphi 0, %s89
      %s111 = sphi 0, %s113
      %s114 = sphi 0, %s111
      %s115 = sphi 0, %s114
      %s131 = sphi 0, %s115
    $region4: #{tpu_custom_call.1} parent=1 // loop_header_branch
      %20 = sbr.rel (%p18) target = $region8
    $region5: #{tpu_custom_call.1} parent=1 // loop_body
      %s22 = ssub.s32 %s17, 1
      %s23 = ssub.s32 %s17, 2
      %s30 = sadd.s32 1, %s25
      %p31 = scmp.ge.s32.totalorder %s30, 1
      %s32 = scalar_select %p31, 0, %s30
      %s33 = sadd.s32 1, %s24
      %s34 = scalar_select %p31, %s33, %s24
      %p35 = scmp.ge.s32.totalorder %s34, 2
      %s36 = scalar_select %p35, 0, %s34
      %s37 = ssub.s32 %s24, %s36
      %s38 = ssub.s32 %s25, %s32
      %s39 = sor.u32 %s37, %s38
      %p40 = scmp.eq.s32.totalorder %s39, 0
      %s42 = sadd.s32 %s41, 1
      %s43 = scalar_select %p40, %s41, %s42
      %p46 = pneg %p40
      %p47 = scmp.eq.s32.totalorder %s17, 1
      %p48 = por %p46, %p47
      %p49 = scmp.ne.s32.totalorder %s41, %s44
      %p50 = scmp.eq.s32.totalorder %s17, 0
      %p51 = por %p49, %p50
      %p52 = scmp.ne.s32.totalorder %s41, %s44
      %p53 = scmp.eq.s32.totalorder %s22, 1
      %p54 = por %p52, %p53
      %p55 = scmp.ne.s32.totalorder %s44, %s45
      %p56 = scmp.eq.s32.totalorder %s22, 0
      %p57 = por %p55, %p56
      %p58 = scmp.ne.s32.totalorder %s44, %s45
      %p59 = scmp.eq.s32.totalorder %s23, 1
      %p60 = por %p58, %p59
      %p62 = scmp.ne.s32.totalorder %s45, %s61
      %p63 = scmp.eq.s32.totalorder %s23, 0
      %p64 = por %p62, %p63
      %s66 = sadd.s32 %s65, 1
      %p69 = scmp.eq.s32.totalorder %s17, 1
      %p70 = scmp.ne.s32.totalorder %s65, %s67
      %p71 = scmp.eq.s32.totalorder %s17, 0
      %p72 = por %p70, %p71
      %p73 = scmp.ne.s32.totalorder %s65, %s67
      %p74 = scmp.eq.s32.totalorder %s22, 1
      %p75 = por %p73, %p74
      %p76 = scmp.ne.s32.totalorder %s67, %s68
      %p77 = scmp.eq.s32.totalorder %s22, 0
      %p78 = por %p76, %p77
      %p79 = scmp.ne.s32.totalorder %s67, %s68
      %p80 = scmp.eq.s32.totalorder %s23, 1
      %p81 = por %p79, %p80
      %p83 = scmp.ne.s32.totalorder %s68, %s82
      %p84 = scmp.eq.s32.totalorder %s23, 0
      %p85 = por %p83, %p84
      %s87 = sadd.s32 %s86, 1
      %p90 = scmp.eq.s32.totalorder %s17, 1
      %p91 = scmp.ne.s32.totalorder %s86, %s88
      %p92 = scmp.eq.s32.totalorder %s17, 0
      %p93 = por %p91, %p92
      %p94 = scmp.ne.s32.totalorder %s86, %s88
      %p95 = scmp.eq.s32.totalorder %s22, 1
      %p96 = por %p94, %p95
      %p97 = scmp.ne.s32.totalorder %s88, %s89
      %p98 = scmp.eq.s32.totalorder %s22, 0
      %p99 = por %p97, %p98
      %p100 = scmp.ne.s32.totalorder %s88, %s89
      %p101 = scmp.eq.s32.totalorder %s23, 1
      %p102 = por %p100, %p101
      %p104 = scmp.ne.s32.totalorder %s89, %s103
      %p105 = scmp.eq.s32.totalorder %s23, 0
      %p106 = por %p104, %p105
      %s107 = ssub.s32 %s24, %s36
      %s108 = ssub.s32 %s25, %s32
      %s109 = sor.u32 %s107, %s108
      %p110 = scmp.eq.s32.totalorder %s109, 0
      %s112 = sadd.s32 %s111, 1
      %s113 = scalar_select %p110, %s111, %s112
      %p116 = pneg %p110
      %p117 = scmp.eq.s32.totalorder %s17, 1
      %p118 = por %p116, %p117
      %p119 = scmp.ne.s32.totalorder %s111, %s114
      %p120 = scmp.eq.s32.totalorder %s17, 0
      %p121 = por %p119, %p120
      %p122 = scmp.ne.s32.totalorder %s111, %s114
      %p123 = scmp.eq.s32.totalorder %s22, 1
      %p124 = por %p122, %p123
      %p125 = scmp.ne.s32.totalorder %s114, %s115
      %p126 = scmp.eq.s32.totalorder %s22, 0
      %p127 = por %p125, %p126
      %p128 = scmp.ne.s32.totalorder %s114, %s115
      %p129 = scmp.eq.s32.totalorder %s23, 1
      %p130 = por %p128, %p129
      %p132 = scmp.ne.s32.totalorder %s115, %s131
      %p133 = scmp.eq.s32.totalorder %s23, 0
      %p134 = por %p132, %p133
      %p135 = scmp.le.s32.totalorder 1, %s17
      %p136 = scmp.lt.s32.totalorder %s17, 3
      %p137 = pnand %p135, %p136
      %p138 = pneg %p137
      // Predicated region
      $region9: #{tpu_custom_call.1} parent=5 // pred_check
        _
      $region10: #{tpu_custom_call.1} parent=5 // pred_check_branch
        %140 = sbr.rel (%p137) target = $region12
      $region11: #{tpu_custom_call.1} parent=5 // pred_region
        %s141 = ssub.s32 %s17, 1
        // Predicated region
        $region13: #{tpu_custom_call.1} parent=11 // pred_check
          %p142 = pneg %p78
        $region14: #{tpu_custom_call.1} parent=11 // pred_check_branch
          %144 = sbr.rel (%p142) target = $region16
        $region15: #{tpu_custom_call.1} parent=11 // pred_region
          %146 = vsyncadd [#allocation5], 0
          %s148 = sshll.u32 %s1, 4
          %s149 = int_to_ptr.hbm [resolvable:$true] %s148
          %151 = dma.hbm_to_smem %s149, 64, [#allocation7], [#allocation5]
        $region16: #{tpu_custom_call.1} parent=11 // pred_fallthru
          _
        // Predicated region
        $region17: #{tpu_custom_call.1} parent=11 // pred_check
          %p152 = pneg %p99
        $region18: #{tpu_custom_call.1} parent=11 // pred_check_branch
          %154 = sbr.rel (%p152) target = $region20
        $region19: #{tpu_custom_call.1} parent=11 // pred_region
          %156 = vsyncadd [#allocation6], 0
          %s158 = sshll.u32 %s2, 4
          %s159 = int_to_ptr.vmem [resolvable:$true] %s158
          %161 = dma.vmem_to_smem %s159, 16, [#allocation8], [#allocation6]
        $region20: #{tpu_custom_call.1} parent=11 // pred_fallthru
          _
      $region12: #{tpu_custom_call.1} parent=5 // pred_fallthru
        _
      %p162 = scmp.lt.s32.totalorder %s17, 2
      // Predicated region
      $region21: #{tpu_custom_call.1} parent=5 // pred_check
        %p163 = pneg %p162
      $region22: #{tpu_custom_call.1} parent=5 // pred_check_branch
        %165 = sbr.rel (%p163) target = $region24
      $region23: #{tpu_custom_call.1} parent=5 // pred_region
        // Predicated region
        $region25: #{tpu_custom_call.1} parent=23 // pred_check
          %p166 = pneg %p51
        $region26: #{tpu_custom_call.1} parent=23 // pred_check_branch
          %168 = sbr.rel (%p166) target = $region28
        $region27: #{tpu_custom_call.1} parent=23 // pred_region
          %s169 = sand.u32 %s41, 1
          %s170 = scalar_lea.sflag [#allocation3], %s169
          %s171 = sand.u32 %s41, 1
          %s172 = smul.addr %s171, 8
          %s173 = scalar_lea.vmem [#allocation2], %s172
          %s174 = smul.u32 2, %s25
          %176 = vsyncadd %s170, 0
          %s177 = smul.addr %s24, 2
          %s178 = sadd.s32 %s174, %s177
          %s179 = smul.addr %s178, 4
          %s180 = scalar_lea.hbm %s0, %s179
          %s182 = sshll.u32 %s180, 4
          %s183 = int_to_ptr.hbm [resolvable:$true] %s182
          %s184 = sshll.u32 %s173, 4
          %s185 = int_to_ptr.vmem [resolvable:$true] %s184
          %187 = dma.hbm_to_vmem [thread:$0]  %s183, 128, %s185, %s170
        $region28: #{tpu_custom_call.1} parent=23 // pred_fallthru
          _
      $region24: #{tpu_custom_call.1} parent=5 // pred_fallthru
        _
      %p188 = scmp.le.s32.totalorder 1, %s17
      %p189 = scmp.lt.s32.totalorder %s17, 3
      %p190 = pnand %p188, %p189
      %p191 = pneg %p190
      // Predicated region
      $region29: #{tpu_custom_call.1} parent=5 // pred_check
        _
      $region30: #{tpu_custom_call.1} parent=5 // pred_check_branch
        %193 = sbr.rel (%p190) target = $region32
      $region31: #{tpu_custom_call.1} parent=5 // pred_region
        %s194 = ssub.s32 %s17, 1
        %s195 = sand.u32 %s44, 1
        %s196 = scalar_lea.sflag [#allocation3], %s195
        %s197 = sand.u32 %s44, 1
        %s198 = smul.addr %s197, 8
        %s199 = scalar_lea.vmem [#allocation2], %s198
        // Predicated region
        $region33: #{tpu_custom_call.1} parent=31 // pred_check
          %p200 = pneg %p57
        $region34: #{tpu_custom_call.1} parent=31 // pred_check_branch
          %202 = sbr.rel (%p200) target = $region36
        $region35: #{tpu_custom_call.1} parent=31 // pred_region
          %204 = dma.done %s196, 128
        $region36: #{tpu_custom_call.1} parent=31 // pred_fallthru
          _
        // Predicated region
        $region37: #{tpu_custom_call.1} parent=31 // pred_check
          %p205 = pneg %p78
        $region38: #{tpu_custom_call.1} parent=31 // pred_check_branch
          %207 = sbr.rel (%p205) target = $region40
        $region39: #{tpu_custom_call.1} parent=31 // pred_region
          %209 = dma.done [#allocation5], 64
        $region40: #{tpu_custom_call.1} parent=31 // pred_fallthru
          _
        // Predicated region
        $region41: #{tpu_custom_call.1} parent=31 // pred_check
          %p210 = pneg %p99
        $region42: #{tpu_custom_call.1} parent=31 // pred_check_branch
          %212 = sbr.rel (%p210) target = $region44
        $region43: #{tpu_custom_call.1} parent=31 // pred_region
          %214 = dma.done [#allocation6], 16
        $region44: #{tpu_custom_call.1} parent=31 // pred_fallthru
          _
        %215 = sfence
        %s216 = sand.u32 %s44, 1
        %s217 = scalar_lea.sflag [#allocation3], %s216
        %s218 = sand.u32 %s44, 1
        %s219 = smul.addr %s218, 8
        %s220 = scalar_lea.vmem [#allocation2], %s219
        %p221 = pneg %p57
        %p222 = pneg %p54
        %p223 = pneg %p78
        %p224 = pneg %p75
        %p225 = pneg %p99
        %p226 = pneg %p96
        %p227 = pneg %p127
        %p228 = pneg %p124
        %s229 = sand.u32 %s114, 1
        %s230 = scalar_lea.sflag [#allocation4], %s229
        %s231 = sand.u32 %s114, 1
        %s232 = smul.addr %s231, 8
        %s233 = scalar_lea.vmem [#allocation9], %s232
        %s234 = smul.u32 2, %s27
        %s235 = smul.u32 2, %s27
        %v236 = vld [vmem:[%s199] ss:$4 sm:$0x3]
        %s237 = sld [smem:[#allocation7]]
        %v238 = vstv %s237
        %v239 = vmul.f32 %v238, %v236
        %s240 = sld [smem:[#allocation8]]
        %v241 = vstv %s240
        %v242 = vadd.f32 %v239, %v241
        %v243 = vadd.f32 %v236, %v242
        %s244 = sld [smem:[#allocation7 + $0x1]]
        %s245 = scalar_lea.vmem %s199, 1 [#allocation2]
        %v246 = vld [vmem:[%s245] ss:$4 sm:$0x3]
        %v247 = vstv %s244
        %v248 = vmul.f32 %v247, %v246
        %v249 = vadd.f32 %v243, %v248
        %s250 = sld [smem:[#allocation7 + $0x2]]
        %s251 = scalar_lea.vmem %s199, 2 [#allocation2]
        %v252 = vld [vmem:[%s251] ss:$4 sm:$0x3]
        %v253 = vstv %s250
        %v254 = vmul.f32 %v253, %v252
        %v255 = vadd.f32 %v249, %v254
        %s256 = sld [smem:[#allocation7 + $0x3]]
        %s257 = scalar_lea.vmem %s199, 3 [#allocation2]
        %v258 = vld [vmem:[%s257] ss:$4 sm:$0x3]
        %v259 = vstv %s256
        %v260 = vmul.f32 %v259, %v258
        %v261 = vadd.f32 %v255, %v260
        %v262 = vlaneseq
        %vm263 = vcmp.ge.s32.totalorder %v262, 0
        %vm264 = vcmp.lt.s32.totalorder %v262, 256
        %vm265 = vmand %vm263, %vm264
        %266 = vst.msk [vmem:[%s233] ss:$4 sm:$0x3] %vm265, %v261
        %v267 = vld [vmem:[%s245] ss:$4 sm:$0x3]
        %s268 = sld [smem:[#allocation7 + $0x81]]
        %v269 = vstv %s268
        %v270 = vmul.f32 %v269, %v267
        %s271 = sld [smem:[#allocation8 + $0x1]]
        %v272 = vstv %s271
        %v273 = vadd.f32 %v270, %v272
        %v274 = vadd.f32 %v267, %v273
        %s275 = sld [smem:[#allocation7 + $0x80]]
        %v276 = vld [vmem:[%s199] ss:$4 sm:$0x3]
        %v277 = vstv %s275
        %v278 = vmul.f32 %v277, %v276
        %v279 = vadd.f32 %v274, %v278
        %s280 = sld [smem:[#allocation7 + $0x82]]
        %v281 = vld [vmem:[%s251] ss:$4 sm:$0x3]
        %v282 = vstv %s280
        %v283 = vmul.f32 %v282, %v281
        %v284 = vadd.f32 %v279, %v283
        %s285 = sld [smem:[#allocation7 + $0x83]]
        %v286 = vld [vmem:[%s257] ss:$4 sm:$0x3]
        %v287 = vstv %s285
        %v288 = vmul.f32 %v287, %v286
        %v289 = vadd.f32 %v284, %v288
        %s290 = scalar_lea.vmem %s233, 1 [#allocation9]
        %291 = vst.msk [vmem:[%s290] ss:$4 sm:$0x3] %vm265, %v289
        %v292 = vld [vmem:[%s251] ss:$4 sm:$0x3]
        %s293 = sld [smem:[#allocation7 + $0x102]]
        %v294 = vstv %s293
        %v295 = vmul.f32 %v294, %v292
        %s296 = sld [smem:[#allocation8 + $0x2]]
        %v297 = vstv %s296
        %v298 = vadd.f32 %v295, %v297
        %v299 = vadd.f32 %v292, %v298
        %s300 = sld [smem:[#allocation7 + $0x100]]
        %v301 = vld [vmem:[%s199] ss:$4 sm:$0x3]
        %v302 = vstv %s300
        %v303 = vmul.f32 %v302, %v301
        %v304 = vadd.f32 %v299, %v303
        %s305 = sld [smem:[#allocation7 + $0x101]]
        %v306 = vld [vmem:[%s245] ss:$4 sm:$0x3]
        %v307 = vstv %s305
        %v308 = vmul.f32 %v307, %v306
        %v309 = vadd.f32 %v304, %v308
        %s310 = sld [smem:[#allocation7 + $0x103]]
        %v311 = vld [vmem:[%s257] ss:$4 sm:$0x3]
        %v312 = vstv %s310
        %v313 = vmul.f32 %v312, %v311
        %v314 = vadd.f32 %v309, %v313
        %s315 = scalar_lea.vmem %s233, 2 [#allocation9]
        %316 = vst.msk [vmem:[%s315] ss:$4 sm:$0x3] %vm265, %v314
        %v317 = vld [vmem:[%s257] ss:$4 sm:$0x3]
        %s318 = sld [smem:[#allocation7 + $0x183]]
        %v319 = vstv %s318
        %v320 = vmul.f32 %v319, %v317
        %s321 = sld [smem:[#allocation8 + $0x3]]
        %v322 = vstv %s321
        %v323 = vadd.f32 %v320, %v322
        %v324 = vadd.f32 %v317, %v323
        %s325 = sld [smem:[#allocation7 + $0x180]]
        %v326 = vld [vmem:[%s199] ss:$4 sm:$0x3]
        %v327 = vstv %s325
        %v328 = vmul.f32 %v327, %v326
        %v329 = vadd.f32 %v324, %v328
        %s330 = sld [smem:[#allocation7 + $0x181]]
        %v331 = vld [vmem:[%s245] ss:$4 sm:$0x3]
        %v332 = vstv %s330
        %v333 = vmul.f32 %v332, %v331
        %v334 = vadd.f32 %v329, %v333
        %s335 = sld [smem:[#allocation7 + $0x182]]
        %v336 = vld [vmem:[%s251] ss:$4 sm:$0x3]
        %v337 = vstv %s335
        %v338 = vmul.f32 %v337, %v336
        %v339 = vadd.f32 %v334, %v338
        %s340 = scalar_lea.vmem %s233, 3 [#allocation9]
        %341 = vst.msk [vmem:[%s340] ss:$4 sm:$0x3] %vm265, %v339
        %s342 = sand.u32 %s114, 1
        %s343 = scalar_lea.sflag [#allocation4], %s342
        %s344 = sand.u32 %s114, 1
        %s345 = smul.addr %s344, 8
        %s346 = scalar_lea.vmem [#allocation9], %s345
        // Predicated region
        $region45: #{tpu_custom_call.1} parent=31 // pred_check
          %p347 = pneg %p124
        $region46: #{tpu_custom_call.1} parent=31 // pred_check_branch
          %349 = sbr.rel (%p347) target = $region48
        $region47: #{tpu_custom_call.1} parent=31 // pred_region
          %s350 = smul.u32 2, %s27
          %352 = vsyncadd %s343, 0
          %s353 = smul.addr %s26, 2
          %s354 = sadd.s32 %s350, %s353
          %s355 = smul.addr %s354, 4
          %s356 = scalar_lea.hbm %s3, %s355
          %s358 = sshll.u32 %s346, 4
          %s359 = int_to_ptr.vmem [resolvable:$true] %s358
          %s360 = sshll.u32 %s356, 4
          %s361 = int_to_ptr.hbm [resolvable:$true] %s360
          %363 = dma.vmem_to_hbm [thread:$0]  %s359, 128, %s361, %s343
        $region48: #{tpu_custom_call.1} parent=31 // pred_fallthru
          _
      $region32: #{tpu_custom_call.1} parent=5 // pred_fallthru
        _
      %p364 = scmp.le.s32.totalorder 2, %s17
      // Predicated region
      $region49: #{tpu_custom_call.1} parent=5 // pred_check
        %p365 = pneg %p364
      $region50: #{tpu_custom_call.1} parent=5 // pred_check_branch
        %367 = sbr.rel (%p365) target = $region52
      $region51: #{tpu_custom_call.1} parent=5 // pred_region
        %s368 = ssub.s32 %s17, 2
        // Predicated region
        $region53: #{tpu_custom_call.1} parent=51 // pred_check
          %p369 = pneg %p130
        $region54: #{tpu_custom_call.1} parent=51 // pred_check_branch
          %371 = sbr.rel (%p369) target = $region56
        $region55: #{tpu_custom_call.1} parent=51 // pred_region
          %s372 = sand.u32 %s115, 1
          %s373 = scalar_lea.sflag [#allocation4], %s372
          %s374 = sand.u32 %s115, 1
          %s375 = smul.addr %s374, 8
          %s376 = scalar_lea.vmem [#allocation9], %s375
          %378 = dma.done %s373, 128
        $region56: #{tpu_custom_call.1} parent=51 // pred_fallthru
          _
      $region52: #{tpu_custom_call.1} parent=5 // pred_fallthru
        _
    $region6: #{tpu_custom_call.1} parent=1 // loop_footer
      %s21 = sadd.s32 1, %s17
    $region7: #{tpu_custom_call.1} parent=1 // loop_footer_branch
      %16 = sbr.rel target = $region3
    $region8: #{tpu_custom_call.1} parent=1 // loop_exit
      _
    %379 = vsyncpa [#allocation3], 1
    %s380 = scalar_lea.sflag [#allocation3], 1
    %381 = vsyncpa %s380, 1
    %382 = vsyncpa [#allocation4], 1
    %s383 = scalar_lea.sflag [#allocation4], 1
    %384 = vsyncpa %s383, 1
    %385 = vsyncpa [#allocation5], 1
    %s386 = scalar_lea.sflag [#allocation5], 1
    %387 = vsyncpa %s386, 1
    %388 = vsyncpa [#allocation6], 1
    %s389 = scalar_lea.sflag [#allocation6], 1
    %390 = vsyncpa %s389, 1

</llo_original>
